<compile_context>
chip_gen: v6e
topology: v6e:2x2x1
jax: 0.10.0
libtpu: 0.0.40
codegen_flags: <defaults>
</compile_context>

<pallas_src>
import functools

import jax
import jax.numpy as jnp
from jax.experimental import pallas as pl
from jax.experimental.pallas import tpu as pltpu


_VMEM_CAP_BYTES = 48 * 1024 * 1024   # cap for the scoped-VMEM limit (safe on v7x: 64 MiB/TC)
_NUM_BUFFERS = 2                     # BlockSpec double-buffering


def _grpo_loss_kernel(logp_ref, old_ref, adv_ref, mask_ref, out_ref, acc_ref,
                      *, adv_per_row: bool, inv_divisor: float):
    """Grid step (i, t): (tb, tt) tile of batch-block i, sequence chunk t.

    The (tb, 1) output block is resident across the t (reduction) axis; acc_ref
    holds the running masked row sum in f32.
    """
    t = pl.program_id(1)

    @pl.when(t == 0)
    def _init():
        acc_ref[...] = jnp.zeros_like(acc_ref)

    # Casts happen on-chip; HBM traffic stays in the inputs' native dtypes.
    ratio = jnp.exp(logp_ref[...].astype(jnp.float32)
                    - old_ref[...].astype(jnp.float32))        # EUP exp
    mask = mask_ref[...].astype(jnp.float32)

    if adv_per_row:
        # Per-row advantage factored out of the full-width elementwise work:
        # accumulate sum(ratio * mask); apply (-adv) once per row at the end.
        acc_ref[...] += jnp.sum(ratio * mask, axis=-1, keepdims=True)
    else:
        adv = adv_ref[...].astype(jnp.float32)
        acc_ref[...] += jnp.sum(-(ratio * adv) * mask, axis=-1, keepdims=True)

    @pl.when(t == pl.num_programs(1) - 1)
    def _finalize():
        if adv_per_row:
            out_ref[...] = (-adv_ref[...].astype(jnp.float32)) * acc_ref[...] * inv_divisor
        else:
            out_ref[...] = acc_ref[...] * inv_divisor


def _largest_aligned_divisor(n: int, limit: int, aligns=(32, 8)):
    """Largest divisor of n that is <= limit and a multiple of one of `aligns`
    (alignments tried in order). Returns n itself if n <= limit; None if nothing fits."""
    limit = min(limit, n)
    if limit <= 0:
        return None
    if n <= limit:
        return n
    for a in aligns:
        d = (limit // a) * a
        while d >= a:
            if n % d == 0:
                return d
            d -= a
    return None


def _plan_tiling(B: int, T: int, wide_itemsizes):
    """Pick (batch_tile, seq_tile, vmem_limit_bytes) for the streaming kernel."""
    stream_bytes = sum(wide_itemsizes)            # bytes/elem across the streamed (tb, tt) inputs
    budget = (_VMEM_CAP_BYTES * 3) // 4           # headroom for adv/out blocks + compiler scratch

    # --- sequence tile: full rows if one minimal aligned slab fits, else tile T ---
    min_tb = 8 if B % 8 == 0 else B
    tt = T
    if _NUM_BUFFERS * stream_bytes * min_tb * T > budget:
        fit = budget // (_NUM_BUFFERS * stream_bytes * min_tb)
        tt = _largest_aligned_divisor(T, max(fit, 128), (128,)) or T

    # --- batch tile: as many rows as fit the budget ... ---
    max_rows = max(1, budget // (_NUM_BUFFERS * stream_bytes * tt))
    # ... but keep >= 2 batch grid steps (both v7x TensorCores stream) as long as
    # each step still moves >= ~4 MiB of input bytes.
    half = B // 2
    if half >= 8 and stream_bytes * min(half, max_rows) * tt >= (4 << 20):
        max_rows = min(max_rows, half)
    tb = _largest_aligned_divisor(B, max_rows, (32, 8))
    if tb is None:
        # No sublane-aligned divisor of B fits: fall back to the full batch and,
        # if needed, shrink the sequence tile so the whole-batch slab still fits.
        tb = B
        if _NUM_BUFFERS * stream_bytes * B * tt > budget:
            fit = budget // (_NUM_BUFFERS * stream_bytes * B)
            tt = _largest_aligned_divisor(T, max(fit, 128), (128,)) or tt

    # --- scoped-VMEM limit from the actual double-buffered footprint ---
    footprint = _NUM_BUFFERS * stream_bytes * tb * tt      # wide streams
    footprint += _NUM_BUFFERS * tb * 2 * 4                 # (tb, 1) adv + out blocks (f32)
    footprint += tb * 4                                    # f32 accumulator scratch
    vmem_limit = int(min(_VMEM_CAP_BYTES, max(2 * footprint, 16 << 20)))
    return tb, tt, vmem_limit


def grpo_loss(log_probs, old_log_probs, advantages, action_mask=None,
              clip_eps: float = 0.2, kl_weight: float = 0.01,
              *, batch_tile: int | None = None, seq_tile: int | None = None):
    """JAX wrapper mirroring GRPOLoss.forward. Returns a scalar f32 loss."""
    del clip_eps, kl_weight   # accepted but unused by the reference forward pass
    B, T = log_probs.shape
    assert old_log_probs.shape == (B, T)

    if action_mask is None:
        # masked_mean(mask=None) falls back to .mean(dim=-1) in the reference.
        mask = jnp.ones((B, T), jnp.int8)
        inv_divisor = 1.0 / float(T)
    else:
        assert action_mask.shape == (B, T)
        mask = action_mask
        inv_divisor = 1.0 / 1024.0    # hard-coded divisor in the reference masked_mean

    adv = jnp.asarray(advantages)
    if adv.ndim == 1:
        adv = adv.reshape(B, 1)       # one advantage per row (the usual GRPO case)
    if adv.shape == (B, 1):
        adv_per_row = True
    elif adv.shape == (B, T):
        adv_per_row = False
        # A full-width f32 advantage stream costs as many HBM bytes as both log-prob
        # streams combined; bf16 halves it (ratio is bf16-sourced, impact negligible).
        if adv.dtype == jnp.float32:
            adv = adv.astype(jnp.bfloat16)
    else:
        raise ValueError(f"unsupported advantages shape {adv.shape}")

    wide_itemsizes = [jnp.dtype(log_probs.dtype).itemsize,
                      jnp.dtype(old_log_probs.dtype).itemsize,
                      jnp.dtype(mask.dtype).itemsize]
    if not adv_per_row:
        wide_itemsizes.append(jnp.dtype(adv.dtype).itemsize)

    tb, tt, vmem_limit = _plan_tiling(B, T, wide_itemsizes)
    if batch_tile is not None:
        tb = batch_tile
    if seq_tile is not None:
        tt = seq_tile
    assert B % tb == 0 and T % tt == 0, (tb, tt)

    def wide_spec():
        return pl.BlockSpec((tb, tt), lambda i, t: (i, t))

    if adv_per_row:
        adv_spec = pl.BlockSpec((tb, 1), lambda i, t: (i, 0))
    else:
        adv_spec = wide_spec()
    out_spec = pl.BlockSpec((tb, 1), lambda i, t: (i, 0))   # resident over the t reduction

    kernel = functools.partial(_grpo_loss_kernel,
                               adv_per_row=adv_per_row,
                               inv_divisor=inv_divisor)

    per_row = pl.pallas_call(
        kernel,
        out_shape=jax.ShapeDtypeStruct((B, 1), jnp.float32),
        grid_spec=pltpu.PrefetchScalarGridSpec(
            num_scalar_prefetch=0,
            grid=(B // tb, T // tt),
            in_specs=[wide_spec(),   # log_probs      (native dtype)
                      wide_spec(),   # old_log_probs  (native dtype)
                      adv_spec,      # advantages     ((B,1) narrow or (B,T) bf16)
                      wide_spec()],  # action_mask    (native dtype, e.g. int8)
            out_specs=out_spec,
            scratch_shapes=[pltpu.VMEM((tb, 1), jnp.float32)],
        ),
        compiler_params=pltpu.CompilerParams(
            dimension_semantics=("parallel", "arbitrary"),
            vmem_limit_bytes=vmem_limit,
        ),
    )(log_probs, old_log_probs, adv, mask)

    # Final .mean() over the batch: B scalars, a trivial wrapper-side tree reduce,
    # keeping the batch grid axis fully parallel (both TCs on v7x).
    return jnp.mean(per_row)


def grpo_loss_ref(log_probs, old_log_probs, advantages, action_mask):
    """Pure-JAX reference mirroring the PyTorch code (f32 math)."""
    logp = log_probs.astype(jnp.float32)
    oldp = old_log_probs.astype(jnp.float32)
    adv = jnp.asarray(advantages).astype(jnp.float32)
    if adv.ndim == 1:
        adv = adv.reshape(-1, 1)
    ratio = jnp.exp(logp - oldp)
    loss = -ratio * adv
    if action_mask is None:
        per_row = jnp.mean(loss, axis=-1)
    else:
        per_row = jnp.sum(loss * action_mask.astype(jnp.float32), axis=-1) / 1024.0
    return jnp.mean(per_row)


if __name__ == "__main__":
    key = jax.random.PRNGKey(0)
    B, T = 8, 1024   # small shapes; T = 1024 matches the reference masked_mean divisor

    k1, k2, k3, k4 = jax.random.split(key, 4)
    log_probs = (-jax.nn.softplus(
        jax.random.normal(k1, (B, T), jnp.float32))).astype(jnp.bfloat16)
    old_log_probs = (-jax.nn.softplus(
        jax.random.normal(k2, (B, T), jnp.float32))).astype(jnp.bfloat16)
    advantages = jax.random.normal(k3, (B, 1), jnp.float32)            # per-row GRPO advantages
    action_mask = (jax.random.uniform(k4, (B, T)) > 0.3).astype(jnp.int8)

    loss = grpo_loss(log_probs, old_log_probs, advantages, action_mask,
                     clip_eps=0.2, kl_weight=0.01)
    jax.block_until_ready(loss)

    ref = grpo_loss_ref(log_probs, old_log_probs, advantages, action_mask)
    assert jnp.allclose(loss, ref, rtol=1e-4, atol=1e-5), (loss, ref)

    print("KERNEL_OK")
</pallas_src>

<mosaic_0001>
module attributes {stable_mosaic.version = 11 : i64} {
  func.func @_grpo_loss_kernel(%arg0: i32, %arg1: i32, %arg2: memref<8x1024xbf16, #tpu.memory_space<vmem>>, %arg3: memref<8x1024xbf16, #tpu.memory_space<vmem>>, %arg4: memref<8x1xf32, #tpu.memory_space<vmem>>, %arg5: memref<8x1024xi8, #tpu.memory_space<vmem>>, %arg6: memref<8x1xf32, #tpu.memory_space<vmem>>, %arg7: memref<8x1xf32, #tpu.memory_space<vmem>>) attributes {dimension_semantics = [#tpu.dimension_semantics<parallel>, #tpu.dimension_semantics<arbitrary>], iteration_bounds = array<i64: 1, 1>, scalar_prefetch = 0 : i64, scratch_operands = 1 : i64, tpu.core_type = #tpu.core_type<tc>, window_params = [{transform_indices = @transform_0, window_bounds = array<i64: 8, 1024>}, {transform_indices = @transform_1, window_bounds = array<i64: 8, 1024>}, {transform_indices = @transform_2, window_bounds = array<i64: 8, 1>}, {transform_indices = @transform_3, window_bounds = array<i64: 8, 1024>}, {transform_indices = @transform_4, window_bounds = array<i64: 8, 1>}]} {
    %c0_i32 = arith.constant 0 : i32
    %0 = arith.cmpi eq, %arg1, %c0_i32 : i32
    %1 = arith.extui %0 : i1 to i32
    %c0_i32_0 = arith.constant 0 : i32
    %2 = arith.cmpi ne, %1, %c0_i32_0 : i32
    scf.if %2 {
      %cst_12 = arith.constant 0.000000e+00 : f32
      %20 = vector.broadcast %cst_12 : f32 to vector<8x1xf32>
      %c0_13 = arith.constant 0 : index
      %c0_14 = arith.constant 0 : index
      %21 = vector.load %arg7[%c0_13, %c0_14] : memref<8x1xf32, #tpu.memory_space<vmem>>, vector<8x1xf32>
      tpu.vector_store %arg7[%c0_13, %c0_14], %20 {strides = array<i32>} : memref<8x1xf32, #tpu.memory_space<vmem>>, vector<8x1xf32>,
    } else {
    }
    %c0 = arith.constant 0 : index
    %c0_1 = arith.constant 0 : index
    %3 = vector.load %arg2[%c0, %c0_1] : memref<8x1024xbf16, #tpu.memory_space<vmem>>, vector<8x1024xbf16>
    %4 = arith.extf %3 : vector<8x1024xbf16> to vector<8x1024xf32>
    %c0_2 = arith.constant 0 : index
    %c0_3 = arith.constant 0 : index
    %5 = vector.load %arg3[%c0_2, %c0_3] : memref<8x1024xbf16, #tpu.memory_space<vmem>>, vector<8x1024xbf16>
    %6 = arith.extf %5 : vector<8x1024xbf16> to vector<8x1024xf32>
    %7 = arith.subf %4, %6 : vector<8x1024xf32>
    %8 = math.exp %7 : vector<8x1024xf32>
    %c0_4 = arith.constant 0 : index
    %c0_5 = arith.constant 0 : index
    %9 = vector.load %arg5[%c0_4, %c0_5] : memref<8x1024xi8, #tpu.memory_space<vmem>>, vector<8x1024xi8>
    %10 = arith.sitofp %9 : vector<8x1024xi8> to vector<8x1024xf32>
    %c0_6 = arith.constant 0 : index
    %c0_7 = arith.constant 0 : index
    %11 = vector.load %arg7[%c0_6, %c0_7] : memref<8x1xf32, #tpu.memory_space<vmem>>, vector<8x1xf32>
    %12 = arith.mulf %8, %10 : vector<8x1024xf32>
    %cst = arith.constant dense<0.000000e+00> : vector<8xf32>
    %13 = vector.multi_reduction <add>, %12, %cst [1] : vector<8x1024xf32> to vector<8xf32>
    %14 = vector.shape_cast %13 : vector<8xf32> to vector<8x1xf32>
    %15 = arith.addf %11, %14 : vector<8x1xf32>
    %c0_8 = arith.constant 0 : index
    %c0_9 = arith.constant 0 : index
    %16 = vector.load %arg7[%c0_8, %c0_9] : memref<8x1xf32, #tpu.memory_space<vmem>>, vector<8x1xf32>
    tpu.vector_store %arg7[%c0_8, %c0_9], %15 {strides = array<i32>} : memref<8x1xf32, #tpu.memory_space<vmem>>, vector<8x1xf32>,
    %c0_i32_10 = arith.constant 0 : i32
    %17 = arith.cmpi eq, %arg1, %c0_i32_10 : i32
    %18 = arith.extui %17 : i1 to i32
    %c0_i32_11 = arith.constant 0 : i32
    %19 = arith.cmpi ne, %18, %c0_i32_11 : i32
    scf.if %19 {
      %c0_12 = arith.constant 0 : index
      %c0_13 = arith.constant 0 : index
      %20 = vector.load %arg4[%c0_12, %c0_13] : memref<8x1xf32, #tpu.memory_space<vmem>>, vector<8x1xf32>
      %cst_14 = arith.constant 0.000000e+00 : f32
      %21 = vector.broadcast %cst_14 : f32 to vector<8x1xf32>
      %22 = arith.subf %21, %20 : vector<8x1xf32>
      %c0_15 = arith.constant 0 : index
      %c0_16 = arith.constant 0 : index
      %23 = vector.load %arg7[%c0_15, %c0_16] : memref<8x1xf32, #tpu.memory_space<vmem>>, vector<8x1xf32>
      %24 = arith.mulf %22, %23 : vector<8x1xf32>
      %cst_17 = arith.constant 9.765625E-4 : f32
      %25 = vector.broadcast %cst_17 : f32 to vector<8x1xf32>
      %26 = arith.mulf %24, %25 : vector<8x1xf32>
      %c0_18 = arith.constant 0 : index
      %c0_19 = arith.constant 0 : index
      %27 = vector.load %arg6[%c0_18, %c0_19] : memref<8x1xf32, #tpu.memory_space<vmem>>, vector<8x1xf32>
      tpu.vector_store %arg6[%c0_18, %c0_19], %26 {strides = array<i32>} : memref<8x1xf32, #tpu.memory_space<vmem>>, vector<8x1xf32>,
    } else {
    }
    return
  }
  func.func @transform_0(%arg0: i32, %arg1: i32) -> (i32, i32) {
    %c0_i32 = arith.constant 0 : i32
    return %arg0, %arg1 : i32, i32
  }
  func.func @transform_1(%arg0: i32, %arg1: i32) -> (i32, i32) {
    %c0_i32 = arith.constant 0 : i32
    return %arg0, %arg1 : i32, i32
  }
  func.func @transform_2(%arg0: i32, %arg1: i32) -> (i32, i32) {
    %c0_i32 = arith.constant 0 : i32
    %c0_i32_0 = arith.constant 0 : i32
    return %arg0, %c0_i32 : i32, i32
  }
  func.func @transform_3(%arg0: i32, %arg1: i32) -> (i32, i32) {
    %c0_i32 = arith.constant 0 : i32
    return %arg0, %arg1 : i32, i32
  }
  func.func @transform_4(%arg0: i32, %arg1: i32) -> (i32, i32) {
    %c0_i32 = arith.constant 0 : i32
    %c0_i32_0 = arith.constant 0 : i32
    return %arg0, %c0_i32 : i32, i32
  }
}

</mosaic_0001>

<llo_original>
// kernel: tpu_custom_call.1
$region0: #{tpu_custom_call.1}
  #allocation0 [shape = 'u32[]', space=smem, size = 0x4, offset = 0x4, fixed_abs, tag = 'smem constant byte address 0x4 - core index']
  #allocation1 [shape = 'u32[144,128]{1,0:T(1,128)}', space=vmem, size = 0x12000, scoped, tag = 'internal scratch']
  #allocation2 [shape = 'f32[8,1]{1,0:T(8,128)}', space=vmem, size = 0x1000, scoped, tag = 'scratch operand']
  %s0 = inlined_call_operand.hbm [shape: bf16[8,1024], index: 0, kind: input, shape index: {}]
  %s1 = inlined_call_operand.hbm [shape: bf16[8,1024], index: 1, kind: input, shape index: {}]
  %s2 = inlined_call_operand.vmem [shape: f32[8,1], index: 2, kind: input, shape index: {}]
  %s3 = inlined_call_operand.hbm [shape: s8[8,1024], index: 3, kind: input, shape index: {}]
  %s4 = inlined_call_operand.vmem [shape: f32[8,1], index: 4, kind: output, shape index: {}]
  %s5 = sld [smem:[#allocation0]]
  $region46: #{tpu_custom_call.1} parent=0
    _
  %s7 = ssub.s32 1, %s5
  %s8 = scalar_select 0, %s7, %s5
  $region1: #{tpu_custom_call.1} parent=0
    #allocation3 [shape = 'u8[16384]{0}', space=vmem, size = 0x4000, scoped, tag = 'input window, operand 0, single buffered']
    #allocation4 [shape = 's32[1]{0}', space=sflag, size = 0x4, scoped, tag = 'scoped memory for tpu_custom_call.1']
    #allocation5 [shape = 'u8[16384]{0}', space=vmem, size = 0x4000, scoped, tag = 'input window, operand 1, single buffered']
    #allocation6 [shape = 's32[1]{0}', space=sflag, size = 0x4, scoped, tag = 'scoped memory for tpu_custom_call.1']
    #allocation7 [shape = 'u8[8192]{0}', space=vmem, size = 0x2000, scoped, tag = 'input window, operand 3, single buffered']
    %9 = vsyncpa [#allocation4], 0
    %10 = vsyncpa [#allocation6], 0
    // Predicated region
    $region2: #{tpu_custom_call.1} parent=1 // pred_check
      _
    $region3: #{tpu_custom_call.1} parent=1 // pred_check_branch
      %12 = sbr.rel (0) target = $region5
    $region4: #{tpu_custom_call.1} parent=1 // pred_region
      %s14 = ssub.s32 512, 512
      %15 = vsyncadd [#allocation4], %s14
      %s17 = sshll.u32 [#allocation3], 4
      %s18 = int_to_ptr.vmem [resolvable:$true] %s17
      %20 = dma.hbm_to_vmem [thread:$0]  %s0, 512, %s18, [#allocation4]
    $region5: #{tpu_custom_call.1} parent=1 // pred_fallthru
      _
    // Predicated region
    $region6: #{tpu_custom_call.1} parent=1 // pred_check
      _
    $region7: #{tpu_custom_call.1} parent=1 // pred_check_branch
      %22 = sbr.rel (0) target = $region9
    $region8: #{tpu_custom_call.1} parent=1 // pred_region
      %s24 = ssub.s32 512, 512
      %25 = vsyncadd [#allocation6], %s24
      %s27 = sshll.u32 [#allocation5], 4
      %s28 = int_to_ptr.vmem [resolvable:$true] %s27
      %30 = dma.hbm_to_vmem [thread:$0]  %s1, 512, %s28, [#allocation6]
    $region9: #{tpu_custom_call.1} parent=1 // pred_fallthru
      _
    // Predicated region
    $region10: #{tpu_custom_call.1} parent=1 // pred_check
      _
    $region11: #{tpu_custom_call.1} parent=1 // pred_check_branch
      %32 = sbr.rel (0) target = $region13
    $region12: #{tpu_custom_call.1} parent=1 // pred_region
      _
    $region13: #{tpu_custom_call.1} parent=1 // pred_fallthru
      _
    // Predicated region
    $region14: #{tpu_custom_call.1} parent=1 // pred_check
      _
    $region15: #{tpu_custom_call.1} parent=1 // pred_check_branch
      %34 = sbr.rel (0) target = $region17
    $region16: #{tpu_custom_call.1} parent=1 // pred_region
      %s36 = ssub.s32 256, 256
      %37 = vsyncadd [#allocation6], %s36
      %s39 = sshll.u32 [#allocation7], 4
      %s40 = int_to_ptr.vmem [resolvable:$true] %s39
      %42 = dma.hbm_to_vmem [thread:$0]  %s3, 256, %s40, [#allocation6]
    $region17: #{tpu_custom_call.1} parent=1 // pred_fallthru
      _
    // Predicated region
    $region18: #{tpu_custom_call.1} parent=1 // pred_check
      _
    $region19: #{tpu_custom_call.1} parent=1 // pred_check_branch
      %44 = sbr.rel (0) target = $region21
    $region20: #{tpu_custom_call.1} parent=1 // pred_region
      %45 = dma.done [#allocation4], 512
    $region21: #{tpu_custom_call.1} parent=1 // pred_fallthru
      _
    // Predicated region
    $region22: #{tpu_custom_call.1} parent=1 // pred_check
      _
    $region23: #{tpu_custom_call.1} parent=1 // pred_check_branch
      %47 = sbr.rel (0) target = $region25
    $region24: #{tpu_custom_call.1} parent=1 // pred_region
      %48 = dma.done [#allocation6], 512
    $region25: #{tpu_custom_call.1} parent=1 // pred_fallthru
      _
    // Predicated region
    $region26: #{tpu_custom_call.1} parent=1 // pred_check
      _
    $region27: #{tpu_custom_call.1} parent=1 // pred_check_branch
      %50 = sbr.rel (0) target = $region29
    $region28: #{tpu_custom_call.1} parent=1 // pred_region
      %51 = dma.done [#allocation6], 256
    $region29: #{tpu_custom_call.1} parent=1 // pred_fallthru
      _
    %p52 = scmp.eq.s32.totalorder 0, 0
    // Predicated region
    $region30: #{tpu_custom_call.1} parent=1 // pred_check
      %p53 = pneg %p52
    $region31: #{tpu_custom_call.1} parent=1 // pred_check_branch
      %55 = sbr.rel (%p53) target = $region33
    $region32: #{tpu_custom_call.1} parent=1 // pred_region
      %vm56 = vcmask 7168
      %57 = vst.msk [vmem:[#allocation2] sm:$0xff] %vm56, 0.0
    $region33: #{tpu_custom_call.1} parent=1 // pred_fallthru
      _
    %v58 = vld [vmem:[#allocation3] sm:$0xff]
    %v59 = vld [vmem:[#allocation3 + $0x8] sm:$0xff]
    %v60 = vld [vmem:[#allocation3 + $0x10] sm:$0xff]
    %v61 = vld [vmem:[#allocation3 + $0x18] sm:$0xff]
    %v62 = vunpack.c.l.bf16 %v58
    %v63 = vunpack.c.h.bf16 %v58
    %v64 = vunpack.c.l.bf16 %v59
    %v65 = vunpack.c.h.bf16 %v59
    %v66 = vunpack.c.l.bf16 %v60
    %v67 = vunpack.c.h.bf16 %v60
    %v68 = vunpack.c.l.bf16 %v61
    %v69 = vunpack.c.h.bf16 %v61
    %v70 = vld [vmem:[#allocation5] sm:$0xff]
    %v71 = vld [vmem:[#allocation5 + $0x8] sm:$0xff]
    %v72 = vld [vmem:[#allocation5 + $0x10] sm:$0xff]
    %v73 = vld [vmem:[#allocation5 + $0x18] sm:$0xff]
    %v74 = vunpack.c.l.bf16 %v70
    %v75 = vunpack.c.h.bf16 %v70
    %v76 = vunpack.c.l.bf16 %v71
    %v77 = vunpack.c.h.bf16 %v71
    %v78 = vunpack.c.l.bf16 %v72
    %v79 = vunpack.c.h.bf16 %v72
    %v80 = vunpack.c.l.bf16 %v73
    %v81 = vunpack.c.h.bf16 %v73
    %v82 = vsub.f32 %v62, %v74
    %v83 = vsub.f32 %v63, %v75
    %v84 = vsub.f32 %v64, %v76
    %v85 = vsub.f32 %v65, %v77
    %v86 = vsub.f32 %v66, %v78
    %v87 = vsub.f32 %v67, %v79
    %v88 = vsub.f32 %v68, %v80
    %v89 = vsub.f32 %v69, %v81
    %v90 = vmul.f32 %v82, 1.442695
    %v91 = vpow.pop %v90
    %v92 = vmul.f32 %v83, 1.442695
    %v93 = vpow.pop %v92
    %v94 = vmul.f32 %v84, 1.442695
    %v95 = vpow.pop %v94
    %v96 = vmul.f32 %v85, 1.442695
    %v97 = vpow.pop %v96
    %v98 = vmul.f32 %v86, 1.442695
    %v99 = vpow.pop %v98
    %v100 = vmul.f32 %v87, 1.442695
    %v101 = vpow.pop %v100
    %v102 = vmul.f32 %v88, 1.442695
    %v103 = vpow.pop %v102
    %v104 = vmul.f32 %v89, 1.442695
    %v105 = vpow.pop %v104
    %v106 = vld [vmem:[#allocation7] sm:$0xff]
    %v107 = vld [vmem:[#allocation7 + $0x8] sm:$0xff]
    %v108 = vunpack.c.0.s8 %v106
    %v109 = vunpack.c.1.s8 %v106
    %v110 = vunpack.c.2.s8 %v106
    %v111 = vunpack.c.3.s8 %v106
    %v112 = vunpack.c.0.s8 %v107
    %v113 = vunpack.c.1.s8 %v107
    %v114 = vunpack.c.2.s8 %v107
    %v115 = vunpack.c.3.s8 %v107
    %v116 = vcvt.s32.f32 %v108
    %v117 = vcvt.s32.f32 %v109
    %v118 = vcvt.s32.f32 %v110
    %v119 = vcvt.s32.f32 %v111
    %v120 = vcvt.s32.f32 %v112
    %v121 = vcvt.s32.f32 %v113
    %v122 = vcvt.s32.f32 %v114
    %v123 = vcvt.s32.f32 %v115
    %v124 = vld [vmem:[#allocation2] sm:$0xff]
    %v125 = vmul.f32 %v91, %v116
    %v126 = vmul.f32 %v93, %v117
    %v127 = vmul.f32 %v95, %v118
    %v128 = vmul.f32 %v97, %v119
    %v129 = vmul.f32 %v99, %v120
    %v130 = vmul.f32 %v101, %v121
    %v131 = vmul.f32 %v103, %v122
    %v132 = vmul.f32 %v105, %v123
    %v133 = vadd.f32 %v125, %v126
    %v134 = vadd.f32 %v133, %v127
    %v135 = vadd.f32 %v134, %v128
    %v136 = vadd.f32 %v135, %v129
    %v137 = vadd.f32 %v136, %v130
    %v138 = vadd.f32 %v137, %v131
    %v139 = vadd.f32 %v138, %v132
    %140 = vadd.xlane.f32.xlu0 %v139
    %v141 = vpop.xlane.xlu0 %140
    %v142 = vadd.f32 %v124, %v141
    %vm143 = vcmask 7168
    %144 = vst.msk [vmem:[#allocation2] sm:$0xff] %vm143, %v142
    // Predicated region
    $region34: #{tpu_custom_call.1} parent=1 // pred_check
      %p145 = pneg %p52
    $region35: #{tpu_custom_call.1} parent=1 // pred_check_branch
      %147 = sbr.rel (%p145) target = $region37
    $region36: #{tpu_custom_call.1} parent=1 // pred_region
      %v148 = vld [vmem:[%s2] sm:$0xff]
      %v149 = vsub.f32 0.0, %v148
      %v150 = vld [vmem:[#allocation2] sm:$0xff]
      %v151 = vmul.f32 %v149, %v150
      %v152 = vmul.f32 %v151, 0.0009765625
      %153 = vst.msk [vmem:[%s4] sm:$0xff] %vm143, %v152
    $region37: #{tpu_custom_call.1} parent=1 // pred_fallthru
      _
    // Predicated region
    $region38: #{tpu_custom_call.1} parent=1 // pred_check
      _
    $region39: #{tpu_custom_call.1} parent=1 // pred_check_branch
      %155 = sbr.rel (0) target = $region41
    $region40: #{tpu_custom_call.1} parent=1 // pred_region
      _
    $region41: #{tpu_custom_call.1} parent=1 // pred_fallthru
      _
    // Predicated region
    $region42: #{tpu_custom_call.1} parent=1 // pred_check
      _
    $region43: #{tpu_custom_call.1} parent=1 // pred_check_branch
      %157 = sbr.rel (0) target = $region45
    $region44: #{tpu_custom_call.1} parent=1 // pred_region
      _
    $region45: #{tpu_custom_call.1} parent=1 // pred_fallthru
      _
    %158 = vsyncpa [#allocation4], 1
    %159 = vsyncpa [#allocation6], 1

</llo_original>
